<compile_context>
chip_gen: v5e
topology: v5e:2x2
jax: 0.10.0
libtpu: 0.0.40
codegen_flags: <defaults>
</compile_context>

<pallas_src>
import math

import jax
import jax.numpy as jnp
import numpy as np
from jax.experimental import pallas as pl
from jax.experimental.pallas import tpu as pltpu

# --- module hyper-parameters (K_PEARL_PE defaults, shrunk to small sizes) ---
K = 8          # order of the Laplacian filter (module default k=16)
MLP_OUT = 16   # mlp_out (mlp_nlayers=1: single Linear(k -> mlp_out))
BN_EPS = 1e-5  # nn.BatchNorm1d default eps


def _lap_chain_kernel(lap_ref, w_ref, feats_ref):
    """Laplacian filter stack for one graph: feats[j] = L^j @ W.

    lap_ref  : [1, N, N]    VMEM
    w_ref    : [1, N, M]    VMEM
    feats_ref: [1, K, N, M] VMEM (output; tiny intermediate)
    """
    lap = lap_ref[0]                         # [N, N]
    cur = w_ref[0]                           # [N, M]
    for j in range(K):
        feats_ref[0, j] = cur
        if j < K - 1:
            # Default MXU precision: the chain is strictly serial, so the
            # 6-pass HIGHEST decomposition was pure critical-path latency.
            cur = jnp.dot(lap, cur, preferred_element_type=jnp.float32)


def _linear_bn_relu_kernel(f_ref, wt_ref, b_ref, g_ref, beta_ref, out_ref):
    """Fused Linear(K -> O) + training-mode BatchNorm1d(O) + ReLU, lane-dense.

    f_ref   : [1, K, N*M] VMEM   filter stack, lane-flattened (one vreg here)
    wt_ref  : [O, K]      VMEM   Linear weight, transposed (out x in)
    b_ref   : [O, 1]      VMEM   Linear bias
    g_ref   : [O, 1]      VMEM   BatchNorm gamma
    beta_ref: [O, 1]      VMEM   BatchNorm beta
    out_ref : [1, O, N*M] VMEM   channel-major, 128-wide unmasked stores
    """
    feats = f_ref[0]                         # [K, NM]
    inv_nm = 1.0 / float(feats.shape[-1])

    # Linear as one small MXU matmul: [O, K] @ [K, NM] -> [O, NM].
    y = jnp.dot(wt_ref[...], feats, preferred_element_type=jnp.float32)
    y = y + b_ref[...]                       # [O, 1] broadcasts over lanes

    # Batched BatchNorm statistics (per channel, training-mode batch stats):
    # two lane-axis reductions for all O channels at once; centered variance
    # for numerical stability.
    mean = jnp.sum(y, axis=-1, keepdims=True) * inv_nm     # [O, 1]
    yc = y - mean
    var = jnp.sum(yc * yc, axis=-1, keepdims=True) * inv_nm
    yhat = yc * jax.lax.rsqrt(var + BN_EPS)
    out_ref[0] = jnp.maximum(yhat * g_ref[...] + beta_ref[...], 0.0)   # ReLU


def k_pearl_pe_core(lap, w, weight, bias, gamma, beta):
    """Per-graph lap_filter -> Linear -> BN -> ReLU.

    Returns the channel-major result [B, MLP_OUT, N, M] (no full-tensor
    transpose in the hot path).
    """
    B, N, _ = lap.shape
    M = w.shape[-1]
    NM = N * M

    parallel = pltpu.CompilerParams(dimension_semantics=("parallel",))

    # --- kernel 1: Laplacian filter stack [W, LW, ..., L^{K-1} W] -----------
    feats = pl.pallas_call(
        _lap_chain_kernel,
        out_shape=jax.ShapeDtypeStruct((B, K, N, M), jnp.float32),
        grid=(B,),
        in_specs=[
            pl.BlockSpec((1, N, N), lambda b: (b, 0, 0)),
            pl.BlockSpec((1, N, M), lambda b: (b, 0, 0)),
        ],
        out_specs=pl.BlockSpec((1, K, N, M), lambda b: (b, 0, 0, 0)),
        compiler_params=parallel,
    )(lap, w)

    # Free contiguous reshape: the sublane->lane repack happens at the XLA
    # level (bitcast) instead of inside the kernel.
    feats_flat = feats.reshape(B, K, NM)

    # Parameters as small VMEM tiles (no SMEM scalar reads).
    wt = jnp.transpose(weight)               # [O, K]
    b2 = bias.reshape(MLP_OUT, 1)
    g2 = gamma.reshape(MLP_OUT, 1)
    beta2 = beta.reshape(MLP_OUT, 1)

    # --- kernel 2: fused Linear + BatchNorm + ReLU, lane-dense --------------
    out = pl.pallas_call(
        _linear_bn_relu_kernel,
        out_shape=jax.ShapeDtypeStruct((B, MLP_OUT, NM), jnp.float32),
        grid=(B,),
        in_specs=[
            pl.BlockSpec((1, K, NM), lambda b: (b, 0, 0)),
            pl.BlockSpec((MLP_OUT, K), lambda b: (0, 0)),
            pl.BlockSpec((MLP_OUT, 1), lambda b: (0, 0)),
            pl.BlockSpec((MLP_OUT, 1), lambda b: (0, 0)),
            pl.BlockSpec((MLP_OUT, 1), lambda b: (0, 0)),
        ],
        out_specs=pl.BlockSpec((1, MLP_OUT, NM), lambda b: (b, 0, 0)),
        compiler_params=parallel,
    )(feats_flat, wt, b2, g2, beta2)

    return out.reshape(B, MLP_OUT, N, M)     # free reshape, stays channel-major


def k_pearl_pe_forward(lap, w, edge_index, weight, bias, gamma, beta):
    """Full K_PEARL_PE.forward (phi replaced by a stand-in pooling)."""
    per_graph = k_pearl_pe_core(lap, w, weight, bias, gamma, beta)  # [B,O,N,M]
    # TODO(synk): `phi` is an external nn.Module (typically a GIN over
    # edge_index) not defined in the reference; use a mean-pool over the
    # sample dimension as a stand-in (edge_index unused).
    del edge_index
    pooled = jnp.mean(per_graph, axis=3)     # pooled on channel-major layout
    return jnp.transpose(pooled, (0, 2, 1))  # [B, N, MLP_OUT] (tiny transpose)


# ----------------------------- pure-JAX reference -----------------------------
def reference_core(lap, w, weight, bias, gamma, beta):
    B = lap.shape[0]
    outs = []
    for b in range(B):
        L, cur = lap[b], w[b]
        feats = [cur]
        for _ in range(K - 1):
            cur = jnp.dot(L, cur, precision=jax.lax.Precision.HIGHEST)
            feats.append(cur)
        filt = jnp.stack(feats, axis=-1)                              # [N,M,K]
        lin = jnp.einsum("nmk,ko->nmo", filt, weight,
                         precision=jax.lax.Precision.HIGHEST) + bias  # [N,M,O]
        mean = lin.mean(axis=(0, 1), keepdims=True)
        var = ((lin - mean) ** 2).mean(axis=(0, 1), keepdims=True)
        y = (lin - mean) / jnp.sqrt(var + BN_EPS) * gamma + beta
        outs.append(jax.nn.relu(y))
    return jnp.stack(outs, axis=0)                                    # [B,N,M,O]


if __name__ == "__main__":
    B, N, M = 2, 16, 8

    key = jax.random.PRNGKey(0)
    k_adj, k_w, k_wt, k_b, k_g, k_beta = jax.random.split(key, 6)

    # Symmetric-normalized graph Laplacian: L = I - D^{-1/2} A D^{-1/2}
    A = jax.random.uniform(k_adj, (B, N, N), jnp.float32)
    A = 0.5 * (A + jnp.swapaxes(A, 1, 2)) * (1.0 - jnp.eye(N, dtype=jnp.float32))
    dinv = 1.0 / jnp.sqrt(A.sum(-1) + 1e-6)
    Lap = jnp.eye(N, dtype=jnp.float32)[None] - dinv[:, :, None] * A * dinv[:, None, :]

    # Random node features (the "random samples" W of the module)
    W = jax.random.normal(k_w, (B, N, M), jnp.float32)

    # Deterministic parameters (Linear(k, mlp_out) + BatchNorm1d(mlp_out))
    weight = jax.random.normal(k_wt, (K, MLP_OUT), jnp.float32) / math.sqrt(K)
    bias = 0.1 * jax.random.normal(k_b, (MLP_OUT,), jnp.float32)
    gamma = 1.0 + 0.1 * jax.random.normal(k_g, (MLP_OUT,), jnp.float32)
    beta = 0.1 * jax.random.normal(k_beta, (MLP_OUT,), jnp.float32)

    # Dummy COO connectivity (only consumed by the external phi; unused here)
    edge_index = jnp.stack(
        [jnp.arange(2 * N, dtype=jnp.int32) % N,
         (jnp.arange(2 * N, dtype=jnp.int32) + 1) % N], axis=0)

    # Run the Pallas kernels (hot path, channel-major) and check against the
    # pure-JAX reference (PyTorch layout); the transpose below is test-only
    # glue, not part of the hot path.
    core = jax.block_until_ready(
        k_pearl_pe_core(Lap, W, weight, bias, gamma, beta))          # [B,O,N,M]
    ref = jax.block_until_ready(
        reference_core(Lap, W, weight, bias, gamma, beta))           # [B,N,M,O]
    ref_cm = jnp.transpose(ref, (0, 3, 1, 2))                        # [B,O,N,M]
    # Tolerance kept at 5e-2: the kernel runs the serial Laplacian chain at
    # default MXU precision (per the perf feedback) while the reference uses
    # HIGHEST, so a small precision gap is expected by design.
    np.testing.assert_allclose(np.asarray(core), np.asarray(ref_cm),
                               rtol=5e-2, atol=5e-2)

    # Full forward (with the stand-in phi)
    pe = jax.block_until_ready(
        k_pearl_pe_forward(Lap, W, edge_index, weight, bias, gamma, beta))
    assert pe.shape == (B, N, MLP_OUT)

    print("KERNEL_OK")
</pallas_src>

<mosaic_0001>
module attributes {stable_mosaic.version = 11 : i64} {
  func.func @_lap_chain_kernel(%arg0: i32, %arg1: memref<1x16x16xf32, #tpu.memory_space<vmem>>, %arg2: memref<1x16x8xf32, #tpu.memory_space<vmem>>, %arg3: memref<1x8x16x8xf32, #tpu.memory_space<vmem>>) attributes {dimension_semantics = [#tpu.dimension_semantics<parallel>], iteration_bounds = array<i64: 2>, scalar_prefetch = 0 : i64, scratch_operands = 0 : i64, tpu.core_type = #tpu.core_type<tc>, window_params = [{transform_indices = @transform_0, window_bounds = array<i64: 1, 16, 16>}, {transform_indices = @transform_1, window_bounds = array<i64: 1, 16, 8>}, {transform_indices = @transform_2, window_bounds = array<i64: 1, 8, 16, 8>}]} {
    %c0 = arith.constant 0 : index
    %c0_0 = arith.constant 0 : index
    %c0_1 = arith.constant 0 : index
    %0 = vector.load %arg1[%c0, %c0_0, %c0_1] : memref<1x16x16xf32, #tpu.memory_space<vmem>>, vector<1x16x16xf32>
    %1 = vector.shape_cast %0 : vector<1x16x16xf32> to vector<16x16xf32>
    %c0_2 = arith.constant 0 : index
    %c0_3 = arith.constant 0 : index
    %c0_4 = arith.constant 0 : index
    %2 = vector.load %arg2[%c0_2, %c0_3, %c0_4] : memref<1x16x8xf32, #tpu.memory_space<vmem>>, vector<1x16x8xf32>
    %3 = vector.shape_cast %2 : vector<1x16x8xf32> to vector<16x8xf32>
    %c0_5 = arith.constant 0 : index
    %c0_6 = arith.constant 0 : index
    %c0_7 = arith.constant 0 : index
    %c0_8 = arith.constant 0 : index
    %4 = vector.load %arg3[%c0_5, %c0_6, %c0_7, %c0_8] : memref<1x8x16x8xf32, #tpu.memory_space<vmem>>, vector<1x1x16x8xf32>
    %5 = vector.shape_cast %4 : vector<1x1x16x8xf32> to vector<16x8xf32>
    %6 = vector.shape_cast %3 : vector<16x8xf32> to vector<1x1x16x8xf32>
    tpu.vector_store %arg3[%c0_5, %c0_6, %c0_7, %c0_8], %6 {strides = array<i32>} : memref<1x8x16x8xf32, #tpu.memory_space<vmem>>, vector<1x1x16x8xf32>,
    %cst = arith.constant dense<0.000000e+00> : vector<16x8xf32>
    %7 = tpu.matmul %1, %3, %cst {dimension_numbers = #tpu.dot_dimension_numbers<[1], [0], [0], [1], [0, 0, 1, 1], [], []>} : vector<16x16xf32>, vector<16x8xf32>, vector<16x8xf32> -> vector<16x8xf32>
    %c0_9 = arith.constant 0 : index
    %c1 = arith.constant 1 : index
    %c0_10 = arith.constant 0 : index
    %c0_11 = arith.constant 0 : index
    %8 = vector.load %arg3[%c0_9, %c1, %c0_10, %c0_11] : memref<1x8x16x8xf32, #tpu.memory_space<vmem>>, vector<1x1x16x8xf32>
    %9 = vector.shape_cast %8 : vector<1x1x16x8xf32> to vector<16x8xf32>
    %10 = vector.shape_cast %7 : vector<16x8xf32> to vector<1x1x16x8xf32>
    tpu.vector_store %arg3[%c0_9, %c1, %c0_10, %c0_11], %10 {strides = array<i32>} : memref<1x8x16x8xf32, #tpu.memory_space<vmem>>, vector<1x1x16x8xf32>,
    %cst_12 = arith.constant dense<0.000000e+00> : vector<16x8xf32>
    %11 = tpu.matmul %1, %7, %cst_12 {dimension_numbers = #tpu.dot_dimension_numbers<[1], [0], [0], [1], [0, 0, 1, 1], [], []>} : vector<16x16xf32>, vector<16x8xf32>, vector<16x8xf32> -> vector<16x8xf32>
    %c0_13 = arith.constant 0 : index
    %c2 = arith.constant 2 : index
    %c0_14 = arith.constant 0 : index
    %c0_15 = arith.constant 0 : index
    %12 = vector.load %arg3[%c0_13, %c2, %c0_14, %c0_15] : memref<1x8x16x8xf32, #tpu.memory_space<vmem>>, vector<1x1x16x8xf32>
    %13 = vector.shape_cast %12 : vector<1x1x16x8xf32> to vector<16x8xf32>
    %14 = vector.shape_cast %11 : vector<16x8xf32> to vector<1x1x16x8xf32>
    tpu.vector_store %arg3[%c0_13, %c2, %c0_14, %c0_15], %14 {strides = array<i32>} : memref<1x8x16x8xf32, #tpu.memory_space<vmem>>, vector<1x1x16x8xf32>,
    %cst_16 = arith.constant dense<0.000000e+00> : vector<16x8xf32>
    %15 = tpu.matmul %1, %11, %cst_16 {dimension_numbers = #tpu.dot_dimension_numbers<[1], [0], [0], [1], [0, 0, 1, 1], [], []>} : vector<16x16xf32>, vector<16x8xf32>, vector<16x8xf32> -> vector<16x8xf32>
    %c0_17 = arith.constant 0 : index
    %c3 = arith.constant 3 : index
    %c0_18 = arith.constant 0 : index
    %c0_19 = arith.constant 0 : index
    %16 = vector.load %arg3[%c0_17, %c3, %c0_18, %c0_19] : memref<1x8x16x8xf32, #tpu.memory_space<vmem>>, vector<1x1x16x8xf32>
    %17 = vector.shape_cast %16 : vector<1x1x16x8xf32> to vector<16x8xf32>
    %18 = vector.shape_cast %15 : vector<16x8xf32> to vector<1x1x16x8xf32>
    tpu.vector_store %arg3[%c0_17, %c3, %c0_18, %c0_19], %18 {strides = array<i32>} : memref<1x8x16x8xf32, #tpu.memory_space<vmem>>, vector<1x1x16x8xf32>,
    %cst_20 = arith.constant dense<0.000000e+00> : vector<16x8xf32>
    %19 = tpu.matmul %1, %15, %cst_20 {dimension_numbers = #tpu.dot_dimension_numbers<[1], [0], [0], [1], [0, 0, 1, 1], [], []>} : vector<16x16xf32>, vector<16x8xf32>, vector<16x8xf32> -> vector<16x8xf32>
    %c0_21 = arith.constant 0 : index
    %c4 = arith.constant 4 : index
    %c0_22 = arith.constant 0 : index
    %c0_23 = arith.constant 0 : index
    %20 = vector.load %arg3[%c0_21, %c4, %c0_22, %c0_23] : memref<1x8x16x8xf32, #tpu.memory_space<vmem>>, vector<1x1x16x8xf32>
    %21 = vector.shape_cast %20 : vector<1x1x16x8xf32> to vector<16x8xf32>
    %22 = vector.shape_cast %19 : vector<16x8xf32> to vector<1x1x16x8xf32>
    tpu.vector_store %arg3[%c0_21, %c4, %c0_22, %c0_23], %22 {strides = array<i32>} : memref<1x8x16x8xf32, #tpu.memory_space<vmem>>, vector<1x1x16x8xf32>,
    %cst_24 = arith.constant dense<0.000000e+00> : vector<16x8xf32>
    %23 = tpu.matmul %1, %19, %cst_24 {dimension_numbers = #tpu.dot_dimension_numbers<[1], [0], [0], [1], [0, 0, 1, 1], [], []>} : vector<16x16xf32>, vector<16x8xf32>, vector<16x8xf32> -> vector<16x8xf32>
    %c0_25 = arith.constant 0 : index
    %c5 = arith.constant 5 : index
    %c0_26 = arith.constant 0 : index
    %c0_27 = arith.constant 0 : index
    %24 = vector.load %arg3[%c0_25, %c5, %c0_26, %c0_27] : memref<1x8x16x8xf32, #tpu.memory_space<vmem>>, vector<1x1x16x8xf32>
    %25 = vector.shape_cast %24 : vector<1x1x16x8xf32> to vector<16x8xf32>
    %26 = vector.shape_cast %23 : vector<16x8xf32> to vector<1x1x16x8xf32>
    tpu.vector_store %arg3[%c0_25, %c5, %c0_26, %c0_27], %26 {strides = array<i32>} : memref<1x8x16x8xf32, #tpu.memory_space<vmem>>, vector<1x1x16x8xf32>,
    %cst_28 = arith.constant dense<0.000000e+00> : vector<16x8xf32>
    %27 = tpu.matmul %1, %23, %cst_28 {dimension_numbers = #tpu.dot_dimension_numbers<[1], [0], [0], [1], [0, 0, 1, 1], [], []>} : vector<16x16xf32>, vector<16x8xf32>, vector<16x8xf32> -> vector<16x8xf32>
    %c0_29 = arith.constant 0 : index
    %c6 = arith.constant 6 : index
    %c0_30 = arith.constant 0 : index
    %c0_31 = arith.constant 0 : index
    %28 = vector.load %arg3[%c0_29, %c6, %c0_30, %c0_31] : memref<1x8x16x8xf32, #tpu.memory_space<vmem>>, vector<1x1x16x8xf32>
    %29 = vector.shape_cast %28 : vector<1x1x16x8xf32> to vector<16x8xf32>
    %30 = vector.shape_cast %27 : vector<16x8xf32> to vector<1x1x16x8xf32>
    tpu.vector_store %arg3[%c0_29, %c6, %c0_30, %c0_31], %30 {strides = array<i32>} : memref<1x8x16x8xf32, #tpu.memory_space<vmem>>, vector<1x1x16x8xf32>,
    %cst_32 = arith.constant dense<0.000000e+00> : vector<16x8xf32>
    %31 = tpu.matmul %1, %27, %cst_32 {dimension_numbers = #tpu.dot_dimension_numbers<[1], [0], [0], [1], [0, 0, 1, 1], [], []>} : vector<16x16xf32>, vector<16x8xf32>, vector<16x8xf32> -> vector<16x8xf32>
    %c0_33 = arith.constant 0 : index
    %c7 = arith.constant 7 : index
    %c0_34 = arith.constant 0 : index
    %c0_35 = arith.constant 0 : index
    %32 = vector.load %arg3[%c0_33, %c7, %c0_34, %c0_35] : memref<1x8x16x8xf32, #tpu.memory_space<vmem>>, vector<1x1x16x8xf32>
    %33 = vector.shape_cast %32 : vector<1x1x16x8xf32> to vector<16x8xf32>
    %34 = vector.shape_cast %31 : vector<16x8xf32> to vector<1x1x16x8xf32>
    tpu.vector_store %arg3[%c0_33, %c7, %c0_34, %c0_35], %34 {strides = array<i32>} : memref<1x8x16x8xf32, #tpu.memory_space<vmem>>, vector<1x1x16x8xf32>,
    return
  }
  func.func @transform_0(%arg0: i32) -> (i32, i32, i32) {
    %c0_i32 = arith.constant 0 : i32
    %c0_i32_0 = arith.constant 0 : i32
    %c0_i32_1 = arith.constant 0 : i32
    return %arg0, %c0_i32, %c0_i32_0 : i32, i32, i32
  }
  func.func @transform_1(%arg0: i32) -> (i32, i32, i32) {
    %c0_i32 = arith.constant 0 : i32
    %c0_i32_0 = arith.constant 0 : i32
    %c0_i32_1 = arith.constant 0 : i32
    return %arg0, %c0_i32, %c0_i32_0 : i32, i32, i32
  }
  func.func @transform_2(%arg0: i32) -> (i32, i32, i32, i32) {
    %c0_i32 = arith.constant 0 : i32
    %c0_i32_0 = arith.constant 0 : i32
    %c0_i32_1 = arith.constant 0 : i32
    %c0_i32_2 = arith.constant 0 : i32
    return %arg0, %c0_i32, %c0_i32_0, %c0_i32_1 : i32, i32, i32, i32
  }
}

</mosaic_0001>

<llo_original>
// kernel: tpu_custom_call.1
$region0: #{tpu_custom_call.1}
  #allocation0 [shape = 'u32[]', space=smem, size = 0x4, offset = 0x4, fixed_abs, tag = 'smem constant byte address 0x4 - core index']
  #allocation1 [shape = 'u32[72,128]{1,0:T(1,128)}', space=vmem, size = 0x9000, scoped, tag = 'internal scratch']
  %s0 = inlined_call_operand.vmem [shape: f32[2,16,16], index: 0, kind: input, shape index: {}]
  %s1 = inlined_call_operand.vmem [shape: f32[2,16,8], index: 1, kind: input, shape index: {}]
  %s2 = inlined_call_operand.vmem [shape: f32[2,8,16,8], index: 2, kind: output, shape index: {}]
  %s3 = sld [smem:[#allocation0]]
  $region41: #{tpu_custom_call.1} parent=0
    _
  %s5 = ssub.s32 1, %s3
  %s6 = scalar_select 0, %s5, %s3
  loop: start=0, step=1, limit=4
  $region2: #{tpu_custom_call.1} parent=0 // loop_pre_header
    _
  $region3: #{tpu_custom_call.1} parent=0 // loop_header
    %s8 = sphi 0, %s12
    %p9 = scmp.ge.s32.totalorder %s8, 4
    %s18 = sphi 0, %s20
    %s21 = sphi 0, %s18
    %s22 = sphi 0, %s21
    %s38 = sphi 0, %s22
    %s44 = sphi 0, %s46
    %s47 = sphi 0, %s44
    %s48 = sphi 0, %s47
    %s64 = sphi 0, %s48
    %s70 = sphi 0, %s72
    %s73 = sphi 0, %s70
    %s74 = sphi 0, %s73
    %s90 = sphi 0, %s74
  $region4: #{tpu_custom_call.1} parent=0 // loop_header_branch
    %11 = sbr.rel (%p9) target = $region8
  $region5: #{tpu_custom_call.1} parent=0 // loop_body
    %s13 = ssub.s32 %s8, 1
    %s14 = ssub.s32 %s8, 2
    %s15 = sadd.s32 %s8, 1
    %s16 = ssub.s32 %s8, %s15
    %p17 = scmp.eq.s32.totalorder %s16, 0
    %s19 = sadd.s32 %s18, 1
    %s20 = scalar_select %p17, %s18, %s19
    %p23 = pneg %p17
    %p24 = scmp.eq.s32.totalorder %s8, 1
    %p25 = por %p23, %p24
    %p26 = scmp.ne.s32.totalorder %s18, %s21
    %p27 = scmp.eq.s32.totalorder %s8, 0
    %p28 = por %p26, %p27
    %p29 = scmp.ne.s32.totalorder %s18, %s21
    %p30 = scmp.eq.s32.totalorder %s13, 1
    %p31 = por %p29, %p30
    %p32 = scmp.ne.s32.totalorder %s21, %s22
    %p33 = scmp.eq.s32.totalorder %s13, 0
    %p34 = por %p32, %p33
    %p35 = scmp.ne.s32.totalorder %s21, %s22
    %p36 = scmp.eq.s32.totalorder %s14, 1
    %p37 = por %p35, %p36
    %p39 = scmp.ne.s32.totalorder %s22, %s38
    %p40 = scmp.eq.s32.totalorder %s14, 0
    %p41 = por %p39, %p40
    %s42 = ssub.s32 %s8, %s15
    %p43 = scmp.eq.s32.totalorder %s42, 0
    %s45 = sadd.s32 %s44, 1
    %s46 = scalar_select %p43, %s44, %s45
    %p49 = pneg %p43
    %p50 = scmp.eq.s32.totalorder %s8, 1
    %p51 = por %p49, %p50
    %p52 = scmp.ne.s32.totalorder %s44, %s47
    %p53 = scmp.eq.s32.totalorder %s8, 0
    %p54 = por %p52, %p53
    %p55 = scmp.ne.s32.totalorder %s44, %s47
    %p56 = scmp.eq.s32.totalorder %s13, 1
    %p57 = por %p55, %p56
    %p58 = scmp.ne.s32.totalorder %s47, %s48
    %p59 = scmp.eq.s32.totalorder %s13, 0
    %p60 = por %p58, %p59
    %p61 = scmp.ne.s32.totalorder %s47, %s48
    %p62 = scmp.eq.s32.totalorder %s14, 1
    %p63 = por %p61, %p62
    %p65 = scmp.ne.s32.totalorder %s48, %s64
    %p66 = scmp.eq.s32.totalorder %s14, 0
    %p67 = por %p65, %p66
    %s68 = ssub.s32 %s8, %s15
    %p69 = scmp.eq.s32.totalorder %s68, 0
    %s71 = sadd.s32 %s70, 1
    %s72 = scalar_select %p69, %s70, %s71
    %p75 = pneg %p69
    %p76 = scmp.eq.s32.totalorder %s8, 1
    %p77 = por %p75, %p76
    %p78 = scmp.ne.s32.totalorder %s70, %s73
    %p79 = scmp.eq.s32.totalorder %s8, 0
    %p80 = por %p78, %p79
    %p81 = scmp.ne.s32.totalorder %s70, %s73
    %p82 = scmp.eq.s32.totalorder %s13, 1
    %p83 = por %p81, %p82
    %p84 = scmp.ne.s32.totalorder %s73, %s74
    %p85 = scmp.eq.s32.totalorder %s13, 0
    %p86 = por %p84, %p85
    %p87 = scmp.ne.s32.totalorder %s73, %s74
    %p88 = scmp.eq.s32.totalorder %s14, 1
    %p89 = por %p87, %p88
    %p91 = scmp.ne.s32.totalorder %s74, %s90
    %p92 = scmp.eq.s32.totalorder %s14, 0
    %p93 = por %p91, %p92
    %p94 = scmp.le.s32.totalorder 1, %s8
    %p95 = scmp.lt.s32.totalorder %s8, 3
    %p96 = pnand %p94, %p95
    %p97 = pneg %p96
    // Predicated region
    $region9: #{tpu_custom_call.1} parent=5 // pred_check
      _
    $region10: #{tpu_custom_call.1} parent=5 // pred_check_branch
      %99 = sbr.rel (%p96) target = $region12
    $region11: #{tpu_custom_call.1} parent=5 // pred_region
      %s100 = ssub.s32 %s8, 1
    $region12: #{tpu_custom_call.1} parent=5 // pred_fallthru
      _
    %p101 = scmp.lt.s32.totalorder %s8, 2
    // Predicated region
    $region13: #{tpu_custom_call.1} parent=5 // pred_check
      %p102 = pneg %p101
    $region14: #{tpu_custom_call.1} parent=5 // pred_check_branch
      %104 = sbr.rel (%p102) target = $region16
    $region15: #{tpu_custom_call.1} parent=5 // pred_region
      // Predicated region
      $region17: #{tpu_custom_call.1} parent=15 // pred_check
        %p105 = pneg %p28
      $region18: #{tpu_custom_call.1} parent=15 // pred_check_branch
        %107 = sbr.rel (%p105) target = $region20
      $region19: #{tpu_custom_call.1} parent=15 // pred_region
        %p108 = scmp.lt.s32.totalorder %s8, 1
        %s109 = scalar_select %p108, %s8, 1
        %s110 = smul.addr %s109, 2
        %s111 = smul.addr %s110, 8
        %s112 = scalar_lea.vmem %s0, %s111
      $region20: #{tpu_custom_call.1} parent=15 // pred_fallthru
        _
      // Predicated region
      $region21: #{tpu_custom_call.1} parent=15 // pred_check
        %p113 = pneg %p54
      $region22: #{tpu_custom_call.1} parent=15 // pred_check_branch
        %115 = sbr.rel (%p113) target = $region24
      $region23: #{tpu_custom_call.1} parent=15 // pred_region
        %p116 = scmp.lt.s32.totalorder %s8, 1
        %s117 = scalar_select %p116, %s8, 1
        %s118 = smul.addr %s117, 2
        %s119 = smul.addr %s118, 8
        %s120 = scalar_lea.vmem %s1, %s119
      $region24: #{tpu_custom_call.1} parent=15 // pred_fallthru
        _
    $region16: #{tpu_custom_call.1} parent=5 // pred_fallthru
      _
    %p121 = scmp.le.s32.totalorder 1, %s8
    %p122 = scmp.lt.s32.totalorder %s8, 3
    %p123 = pnand %p121, %p122
    %p124 = pneg %p123
    // Predicated region
    $region25: #{tpu_custom_call.1} parent=5 // pred_check
      _
    $region26: #{tpu_custom_call.1} parent=5 // pred_check_branch
      %126 = sbr.rel (%p123) target = $region28
    $region27: #{tpu_custom_call.1} parent=5 // pred_region
      %s127 = ssub.s32 %s8, 1
      %p128 = scmp.lt.s32.totalorder %s13, 1
      %s129 = scalar_select %p128, %s13, 1
      %s130 = smul.addr %s129, 2
      %s131 = smul.addr %s130, 8
      %s132 = scalar_lea.vmem %s0, %s131
      %p133 = pneg %p34
      %p134 = pneg %p31
      %p135 = scmp.lt.s32.totalorder %s13, 1
      %s136 = scalar_select %p135, %s13, 1
      %s137 = smul.addr %s136, 2
      %s138 = smul.addr %s137, 8
      %s139 = scalar_lea.vmem %s1, %s138
      %p140 = pneg %p60
      %p141 = pneg %p57
      %p142 = pneg %p86
      %p143 = pneg %p83
      %p144 = scmp.lt.s32.totalorder %s13, 1
      %s145 = scalar_select %p144, %s13, 1
      %s146 = smul.addr %s145, 16
      %s147 = smul.addr %s146, 8
      %s148 = scalar_lea.vmem %s2, %s147
      %p149 = scmp.lt.s32.totalorder %s13, 1
      %s150 = scalar_select %p149, %s13, 1
      %s151 = smul.addr %s150, 2
      %s152 = smul.addr %s151, 8
      %s153 = scalar_lea.vmem %s0, %s152
      %p154 = scmp.lt.s32.totalorder %s13, 1
      %s155 = scalar_select %p154, %s13, 1
      %s156 = smul.addr %s155, 2
      %s157 = smul.addr %s156, 8
      %s158 = scalar_lea.vmem %s1, %s157
      %p159 = scmp.lt.s32.totalorder %s13, 1
      %s160 = scalar_select %p159, %s13, 1
      %s161 = smul.addr %s160, 16
      %s162 = smul.addr %s161, 8
      %s163 = scalar_lea.vmem %s2, %s162
      %v164 = vld [vmem:[%s153] sm:$0xff]
      %v165 = vld [vmem:[%s153 + $0x8] sm:$0xff]
      %v166 = vld [vmem:[%s158] sm:$0xff]
      %v167 = vld [vmem:[%s158 + $0x8] sm:$0xff]
      %vm168 = vcmask 64512
      %169 = vst.msk [vmem:[%s163] sm:$0xff] %vm168, %v166
      %170 = vst.msk [vmem:[%s163 + $0x8] sm:$0xff] %vm168, %v167
      %vm171 = vcmask 130048
      %v173 = vsel %vm171, %v164, 0
      %v176 = vsel %vm171, %v165, 0
      %178 = vmatpush.msra.mxu0 0.0
      %179 = vmatpush.msra.mxu0 0.0
      %180 = vmatpush.msra.mxu0 0.0
      %181 = vmatpush.msra.mxu0 0.0
      %182 = vmatpush.msra.mxu0 0.0
      %183 = vmatpush.msra.mxu0 0.0
      %184 = vmatpush.msra.mxu0 0.0
      %185 = vmatpush.msra.mxu0 0.0
      %186 = vmatpush.msra.mxu0 0.0
      %187 = vmatpush.msra.mxu0 0.0
      %188 = vmatpush.msra.mxu0 0.0
      %189 = vmatpush.msra.mxu0 0.0
      %190 = vmatpush.msra.mxu0 0.0
      %191 = vmatpush.msra.mxu0 0.0
      %192 = vmatpush.msra.mxu0 %v167
      %193 = vmatpush.msra.mxu0 %v166
      %194 = vmatmul.f32.gmra.mxu0 %v173
      %v195 = vpop.f32.mrf.mxu0
      %v196 = vadd.f32 0.0, %v195
      %197 = vmatmul.f32.gmra.mxu0 %v176
      %v198 = vpop.f32.mrf.mxu0
      %v199 = vadd.f32 0.0, %v198
      %200 = vdwg.mxu0
      %s201 = scalar_lea.vmem %s163, 16
      %202 = vst.msk [vmem:[%s201] sm:$0xff] %vm168, %v196
      %203 = vst.msk [vmem:[%s201 + $0x8] sm:$0xff] %vm168, %v199
      %204 = vmatpush.msra.mxu0 0.0
      %205 = vmatpush.msra.mxu0 0.0
      %206 = vmatpush.msra.mxu0 0.0
      %207 = vmatpush.msra.mxu0 0.0
      %208 = vmatpush.msra.mxu0 0.0
      %209 = vmatpush.msra.mxu0 0.0
      %210 = vmatpush.msra.mxu0 0.0
      %211 = vmatpush.msra.mxu0 0.0
      %212 = vmatpush.msra.mxu0 0.0
      %213 = vmatpush.msra.mxu0 0.0
      %214 = vmatpush.msra.mxu0 0.0
      %215 = vmatpush.msra.mxu0 0.0
      %216 = vmatpush.msra.mxu0 0.0
      %217 = vmatpush.msra.mxu0 0.0
      %218 = vmatpush.msra.mxu0 %v199
      %219 = vmatpush.msra.mxu0 %v196
      %220 = vmatmul.f32.gmra.mxu0 %v173
      %v221 = vpop.f32.mrf.mxu0
      %v222 = vadd.f32 0.0, %v221
      %223 = vmatmul.f32.gmra.mxu0 %v176
      %v224 = vpop.f32.mrf.mxu0
      %v225 = vadd.f32 0.0, %v224
      %226 = vdwg.mxu0
      %s227 = scalar_lea.vmem %s163, 32
      %228 = vst.msk [vmem:[%s227] sm:$0xff] %vm168, %v222
      %229 = vst.msk [vmem:[%s227 + $0x8] sm:$0xff] %vm168, %v225
      %230 = vmatpush.msra.mxu0 0.0
      %231 = vmatpush.msra.mxu0 0.0
      %232 = vmatpush.msra.mxu0 0.0
      %233 = vmatpush.msra.mxu0 0.0
      %234 = vmatpush.msra.mxu0 0.0
      %235 = vmatpush.msra.mxu0 0.0
      %236 = vmatpush.msra.mxu0 0.0
      %237 = vmatpush.msra.mxu0 0.0
      %238 = vmatpush.msra.mxu0 0.0
      %239 = vmatpush.msra.mxu0 0.0
      %240 = vmatpush.msra.mxu0 0.0
      %241 = vmatpush.msra.mxu0 0.0
      %242 = vmatpush.msra.mxu0 0.0
      %243 = vmatpush.msra.mxu0 0.0
      %244 = vmatpush.msra.mxu0 %v225
      %245 = vmatpush.msra.mxu0 %v222
      %246 = vmatmul.f32.gmra.mxu0 %v173
      %v247 = vpop.f32.mrf.mxu0
      %v248 = vadd.f32 0.0, %v247
      %249 = vmatmul.f32.gmra.mxu0 %v176
      %v250 = vpop.f32.mrf.mxu0
      %v251 = vadd.f32 0.0, %v250
      %252 = vdwg.mxu0
      %s253 = scalar_lea.vmem %s163, 48
      %254 = vst.msk [vmem:[%s253] sm:$0xff] %vm168, %v248
      %255 = vst.msk [vmem:[%s253 + $0x8] sm:$0xff] %vm168, %v251
      %256 = vmatpush.msra.mxu0 0.0
      %257 = vmatpush.msra.mxu0 0.0
      %258 = vmatpush.msra.mxu0 0.0
      %259 = vmatpush.msra.mxu0 0.0
      %260 = vmatpush.msra.mxu0 0.0
      %261 = vmatpush.msra.mxu0 0.0
      %262 = vmatpush.msra.mxu0 0.0
      %263 = vmatpush.msra.mxu0 0.0
      %264 = vmatpush.msra.mxu0 0.0
      %265 = vmatpush.msra.mxu0 0.0
      %266 = vmatpush.msra.mxu0 0.0
      %267 = vmatpush.msra.mxu0 0.0
      %268 = vmatpush.msra.mxu0 0.0
      %269 = vmatpush.msra.mxu0 0.0
      %270 = vmatpush.msra.mxu0 %v251
      %271 = vmatpush.msra.mxu0 %v248
      %272 = vmatmul.f32.gmra.mxu0 %v173
      %v273 = vpop.f32.mrf.mxu0
      %v274 = vadd.f32 0.0, %v273
      %275 = vmatmul.f32.gmra.mxu0 %v176
      %v276 = vpop.f32.mrf.mxu0
      %v277 = vadd.f32 0.0, %v276
      %278 = vdwg.mxu0
      %s279 = scalar_lea.vmem %s163, 64
      %280 = vst.msk [vmem:[%s279] sm:$0xff] %vm168, %v274
      %281 = vst.msk [vmem:[%s279 + $0x8] sm:$0xff] %vm168, %v277
      %282 = vmatpush.msra.mxu0 0.0
      %283 = vmatpush.msra.mxu0 0.0
      %284 = vmatpush.msra.mxu0 0.0
      %285 = vmatpush.msra.mxu0 0.0
      %286 = vmatpush.msra.mxu0 0.0
      %287 = vmatpush.msra.mxu0 0.0
      %288 = vmatpush.msra.mxu0 0.0
      %289 = vmatpush.msra.mxu0 0.0
      %290 = vmatpush.msra.mxu0 0.0
      %291 = vmatpush.msra.mxu0 0.0
      %292 = vmatpush.msra.mxu0 0.0
      %293 = vmatpush.msra.mxu0 0.0
      %294 = vmatpush.msra.mxu0 0.0
      %295 = vmatpush.msra.mxu0 0.0
      %296 = vmatpush.msra.mxu0 %v277
      %297 = vmatpush.msra.mxu0 %v274
      %298 = vmatmul.f32.gmra.mxu0 %v173
      %v299 = vpop.f32.mrf.mxu0
      %v300 = vadd.f32 0.0, %v299
      %301 = vmatmul.f32.gmra.mxu0 %v176
      %v302 = vpop.f32.mrf.mxu0
      %v303 = vadd.f32 0.0, %v302
      %304 = vdwg.mxu0
      %s305 = scalar_lea.vmem %s163, 80
      %306 = vst.msk [vmem:[%s305] sm:$0xff] %vm168, %v300
      %307 = vst.msk [vmem:[%s305 + $0x8] sm:$0xff] %vm168, %v303
      %308 = vmatpush.msra.mxu0 0.0
      %309 = vmatpush.msra.mxu0 0.0
      %310 = vmatpush.msra.mxu0 0.0
      %311 = vmatpush.msra.mxu0 0.0
      %312 = vmatpush.msra.mxu0 0.0
      %313 = vmatpush.msra.mxu0 0.0
      %314 = vmatpush.msra.mxu0 0.0
      %315 = vmatpush.msra.mxu0 0.0
      %316 = vmatpush.msra.mxu0 0.0
      %317 = vmatpush.msra.mxu0 0.0
      %318 = vmatpush.msra.mxu0 0.0
      %319 = vmatpush.msra.mxu0 0.0
      %320 = vmatpush.msra.mxu0 0.0
      %321 = vmatpush.msra.mxu0 0.0
      %322 = vmatpush.msra.mxu0 %v303
      %323 = vmatpush.msra.mxu0 %v300
      %324 = vmatmul.f32.gmra.mxu0 %v173
      %v325 = vpop.f32.mrf.mxu0
      %v326 = vadd.f32 0.0, %v325
      %327 = vmatmul.f32.gmra.mxu0 %v176
      %v328 = vpop.f32.mrf.mxu0
      %v329 = vadd.f32 0.0, %v328
      %330 = vdwg.mxu0
      %s331 = scalar_lea.vmem %s163, 96
      %332 = vst.msk [vmem:[%s331] sm:$0xff] %vm168, %v326
      %333 = vst.msk [vmem:[%s331 + $0x8] sm:$0xff] %vm168, %v329
      %334 = vmatpush.msra.mxu0 0.0
      %335 = vmatpush.msra.mxu0 0.0
      %336 = vmatpush.msra.mxu0 0.0
      %337 = vmatpush.msra.mxu0 0.0
      %338 = vmatpush.msra.mxu0 0.0
      %339 = vmatpush.msra.mxu0 0.0
      %340 = vmatpush.msra.mxu0 0.0
      %341 = vmatpush.msra.mxu0 0.0
      %342 = vmatpush.msra.mxu0 0.0
      %343 = vmatpush.msra.mxu0 0.0
      %344 = vmatpush.msra.mxu0 0.0
      %345 = vmatpush.msra.mxu0 0.0
      %346 = vmatpush.msra.mxu0 0.0
      %347 = vmatpush.msra.mxu0 0.0
      %348 = vmatpush.msra.mxu0 %v329
      %349 = vmatpush.msra.mxu0 %v326
      %350 = vmatmul.f32.gmra.mxu0 %v173
      %v351 = vpop.f32.mrf.mxu0
      %v352 = vadd.f32 0.0, %v351
      %353 = vmatmul.f32.gmra.mxu0 %v176
      %v354 = vpop.f32.mrf.mxu0
      %v355 = vadd.f32 0.0, %v354
      %356 = vdwg.mxu0
      %s357 = scalar_lea.vmem %s163, 112
      %358 = vst.msk [vmem:[%s357] sm:$0xff] %vm168, %v352
      %359 = vst.msk [vmem:[%s357 + $0x8] sm:$0xff] %vm168, %v355
      %p360 = scmp.lt.s32.totalorder %s13, 1
      %s361 = scalar_select %p360, %s13, 1
      %s362 = smul.addr %s361, 16
      %s363 = smul.addr %s362, 8
      %s364 = scalar_lea.vmem %s2, %s363
      // Predicated region
      $region29: #{tpu_custom_call.1} parent=27 // pred_check
        %p365 = pneg %p83
      $region30: #{tpu_custom_call.1} parent=27 // pred_check_branch
        %367 = sbr.rel (%p365) target = $region32
      $region31: #{tpu_custom_call.1} parent=27 // pred_region
        _
      $region32: #{tpu_custom_call.1} parent=27 // pred_fallthru
        _
    $region28: #{tpu_custom_call.1} parent=5 // pred_fallthru
      _
    %p368 = scmp.le.s32.totalorder 2, %s8
    // Predicated region
    $region33: #{tpu_custom_call.1} parent=5 // pred_check
      %p369 = pneg %p368
    $region34: #{tpu_custom_call.1} parent=5 // pred_check_branch
      %371 = sbr.rel (%p369) target = $region36
    $region35: #{tpu_custom_call.1} parent=5 // pred_region
      %s372 = ssub.s32 %s8, 2
      // Predicated region
      $region37: #{tpu_custom_call.1} parent=35 // pred_check
        %p373 = pneg %p89
      $region38: #{tpu_custom_call.1} parent=35 // pred_check_branch
        %375 = sbr.rel (%p373) target = $region40
      $region39: #{tpu_custom_call.1} parent=35 // pred_region
        %p376 = scmp.lt.s32.totalorder %s14, 1
        %s377 = scalar_select %p376, %s14, 1
        %s378 = smul.addr %s377, 16
        %s379 = smul.addr %s378, 8
        %s380 = scalar_lea.vmem %s2, %s379
      $region40: #{tpu_custom_call.1} parent=35 // pred_fallthru
        _
    $region36: #{tpu_custom_call.1} parent=5 // pred_fallthru
      _
  $region6: #{tpu_custom_call.1} parent=0 // loop_footer
    %s12 = sadd.s32 1, %s8
  $region7: #{tpu_custom_call.1} parent=0 // loop_footer_branch
    %7 = sbr.rel target = $region3
  $region8: #{tpu_custom_call.1} parent=0 // loop_exit
    _

</llo_original>
